<compile_context>
chip_gen: v7x
topology: tpu7x:2x2x1
jax: 0.10.0
libtpu: 0.0.40
codegen_flags: <defaults>
</compile_context>

<pallas_src>
import functools

import jax
import jax.numpy as jnp
from jax.experimental import pallas as pl
from jax.experimental.pallas import tpu as pltpu


# ----------------------------------------------------------------------------
# Kernel: whole sequence in one pallas_call, grid over time steps.
# ----------------------------------------------------------------------------
def _lattice_lstm_seq_kernel(c_num_ref,                       # SMEM (T,) int32 (scalar prefetch)
                             x_ref, c_ref, h0_ref, c0_ref,    # per-step / initial inputs
                             wx_ref, wh_ref, b_ref, awhh_ref,  # resident weights
                             h_out_ref, c_out_ref,            # outputs
                             h_scr, c_scr,                    # VMEM carried state
                             *, hidden_size, max_c):
    H = hidden_size
    t = pl.program_id(0)

    @pl.when(t == 0)
    def _init():
        h_scr[...] = h0_ref[...]
        c_scr[...] = c0_ref[...]

    x = x_ref[0]                      # (1, I)
    h_prev = h_scr[...]               # (1, H)
    c_prev = c_scr[...]               # (1, H)

    # Fused projection -> one (1, 4H) row: [pre_i | pre_o | pre_g | alpha_wi].
    # wx = [W_ih | aW_ih], wh = [W_hh | 0], b = [bias | alpha_bias].
    z = (jnp.dot(x, wx_ref[...], preferred_element_type=jnp.float32)
         + jnp.dot(h_prev, wh_ref[...], preferred_element_type=jnp.float32)
         + b_ref[...])

    i = jax.nn.sigmoid(z[:, 0:H])
    o = jax.nn.sigmoid(z[:, H:2 * H])
    g = jnp.tanh(z[:, 2 * H:3 * H])
    a_wi = z[:, 3 * H:4 * H]

    # Skip-word cell inputs: fixed (MAX_C, H) zero-padded block + valid mask.
    c_in = c_ref[0]                   # (MAX_C, H)
    a_wh = jnp.dot(c_in, awhh_ref[...], preferred_element_type=jnp.float32)
    alpha = jax.nn.sigmoid(a_wi + a_wh)

    cn = c_num_ref[t]
    row_ids = jax.lax.broadcasted_iota(jnp.int32, (max_c, H), 0)
    valid = (row_ids < cn).astype(jnp.float32)

    # softmax over rows [i ; alpha] (exp of sigmoid outputs, as in the
    # reference), padded rows masked out of numerator AND denominator.
    exp_i = jnp.exp(i)
    exp_a = jnp.exp(alpha) * valid
    denom = exp_i + jnp.sum(exp_a, axis=0, keepdims=True)
    numer = exp_i * g + jnp.sum(exp_a * c_in, axis=0, keepdims=True)
    c_merge = numer * pl.reciprocal(denom, approx=False)

    # c_num == 0 branch: coupled gate f = 1 - i (uses the carried cell state).
    c_plain = (1.0 - i) * c_prev + i * g

    c_new = jnp.where(cn > 0, c_merge, c_plain)
    h_new = o * jnp.tanh(c_new)

    h_scr[...] = h_new
    c_scr[...] = c_new
    h_out_ref[0] = h_new
    c_out_ref[0] = c_new


# ----------------------------------------------------------------------------
# Wrappers
# ----------------------------------------------------------------------------
def _pack_params(params, hidden_size):
    """Pack per-gate weights into lane-fused blocks (done once, outside the kernel)."""
    H = hidden_size
    f32 = jnp.float32
    wx = jnp.concatenate([params["weight_ih"], params["alpha_weight_ih"]],
                         axis=1).astype(f32)                       # (I, 4H)
    wh = jnp.concatenate([params["weight_hh"],
                          jnp.zeros((H, H), f32)], axis=1).astype(f32)  # (H, 4H)
    b = jnp.concatenate([params["bias"], params["alpha_bias"]]
                        ).reshape(1, 4 * H).astype(f32)            # (1, 4H)
    awhh = params["alpha_weight_hh"].astype(f32)                   # (H, H)
    return wx, wh, b, awhh


def multi_input_lstm_sequence(params, x_seq, c_pad_seq, c_num_seq, h0, c0):
    """Run T lattice-LSTM cell steps inside a single pallas_call.

    Args:
      x_seq:     (T, 1, input_size) f32
      c_pad_seq: (T, MAX_C, hidden_size) f32 zero-padded skip-word cell inputs
      c_num_seq: (T,) int32 number of valid rows per step (0 => plain LSTM step)
      h0, c0:    (1, hidden_size) f32 initial state
    Returns:
      h_seq, c_seq: each (T, 1, hidden_size) f32
    """
    T, _, I = x_seq.shape
    _, max_c, H = c_pad_seq.shape
    wx, wh, b, awhh = _pack_params(params, H)

    kernel = functools.partial(_lattice_lstm_seq_kernel,
                               hidden_size=H, max_c=max_c)

    grid_spec = pltpu.PrefetchScalarGridSpec(
        num_scalar_prefetch=1,                                     # c_num_seq -> SMEM
        grid=(T,),
        in_specs=[
            pl.BlockSpec((1, 1, I), lambda t, cn: (t, 0, 0)),       # x_seq
            pl.BlockSpec((1, max_c, H), lambda t, cn: (t, 0, 0)),   # c_pad_seq
            pl.BlockSpec((1, H), lambda t, cn: (0, 0)),             # h0
            pl.BlockSpec((1, H), lambda t, cn: (0, 0)),             # c0
            pl.BlockSpec((I, 4 * H), lambda t, cn: (0, 0)),         # wx  (resident)
            pl.BlockSpec((H, 4 * H), lambda t, cn: (0, 0)),         # wh  (resident)
            pl.BlockSpec((1, 4 * H), lambda t, cn: (0, 0)),         # bias row (resident)
            pl.BlockSpec((H, H), lambda t, cn: (0, 0)),             # alpha_weight_hh
        ],
        out_specs=[
            pl.BlockSpec((1, 1, H), lambda t, cn: (t, 0, 0)),       # h_seq
            pl.BlockSpec((1, 1, H), lambda t, cn: (t, 0, 0)),       # c_seq
        ],
        scratch_shapes=[pltpu.VMEM((1, H), jnp.float32),            # carried h
                        pltpu.VMEM((1, H), jnp.float32)],           # carried c
    )

    h_seq, c_seq = pl.pallas_call(
        kernel,
        out_shape=(jax.ShapeDtypeStruct((T, 1, H), jnp.float32),
                   jax.ShapeDtypeStruct((T, 1, H), jnp.float32)),
        grid_spec=grid_spec,
        compiler_params=pltpu.CompilerParams(
            dimension_semantics=("arbitrary",)),   # recurrence over time
    )(c_num_seq.astype(jnp.int32),
      x_seq.astype(jnp.float32), c_pad_seq.astype(jnp.float32),
      h0.astype(jnp.float32), c0.astype(jnp.float32),
      wx, wh, b, awhh)
    return h_seq, c_seq


def multi_input_lstm_cell(params, input_, c_input, hx, max_c=8):
    """Module-equivalent single-step API (thin wrapper over the sequence kernel)."""
    h0, c0 = hx
    H = h0.shape[1]
    assert h0.shape[0] == 1                       # batch == 1, as in the reference
    c_num = len(c_input)
    assert c_num <= max_c
    c_pad = jnp.zeros((1, max_c, H), jnp.float32)
    if c_num:
        c_var = jnp.concatenate(c_input, axis=0).astype(jnp.float32)
        c_pad = c_pad.at[0, :c_num, :].set(c_var)
    x_seq = input_.reshape(1, 1, -1).astype(jnp.float32)
    c_num_seq = jnp.array([c_num], jnp.int32)
    h_seq, c_seq = multi_input_lstm_sequence(params, x_seq, c_pad, c_num_seq, h0, c0)
    return h_seq[0], c_seq[0]


# ----------------------------------------------------------------------------
# Deterministic parameter init (mirrors reset_parameters)
# ----------------------------------------------------------------------------
def init_params(key, input_size, hidden_size):
    k_ih, k_aih = jax.random.split(key)
    orth = jax.nn.initializers.orthogonal()
    return {
        "weight_ih": orth(k_ih, (input_size, 3 * hidden_size), jnp.float32),
        "weight_hh": jnp.tile(jnp.eye(hidden_size, dtype=jnp.float32), (1, 3)),
        "alpha_weight_ih": orth(k_aih, (input_size, hidden_size), jnp.float32),
        "alpha_weight_hh": jnp.eye(hidden_size, dtype=jnp.float32),
        "bias": jnp.zeros((3 * hidden_size,), jnp.float32),
        "alpha_bias": jnp.zeros((hidden_size,), jnp.float32),
    }


# ----------------------------------------------------------------------------
# Pure-JAX reference (line-for-line port of the PyTorch forward)
# ----------------------------------------------------------------------------
def _reference(params, input_, c_input, hx):
    h0, c0 = hx
    H = h0.shape[1]
    wh_b = params["bias"][None, :] + h0 @ params["weight_hh"]
    wi = input_ @ params["weight_ih"]
    pre = wh_b + wi
    i = jax.nn.sigmoid(pre[:, 0:H])
    o = jax.nn.sigmoid(pre[:, H:2 * H])
    g = jnp.tanh(pre[:, 2 * H:3 * H])
    if len(c_input) == 0:
        f = 1 - i
        c1 = f * c0 + i * g
        return o * jnp.tanh(c1), c1
    c_var = jnp.concatenate(c_input, axis=0)
    alpha_wi = params["alpha_bias"][None, :] + input_ @ params["alpha_weight_ih"]
    alpha_wh = c_var @ params["alpha_weight_hh"]
    alpha = jax.nn.sigmoid(alpha_wi + alpha_wh)
    alpha = jnp.exp(jnp.concatenate([i, alpha], axis=0))
    alpha = alpha / jnp.sum(alpha, axis=0)
    c1 = jnp.sum(jnp.concatenate([g, c_var], axis=0) * alpha, axis=0, keepdims=True)
    return o * jnp.tanh(c1), c1


def _reference_sequence(params, x_seq, c_lists, hx):
    h, c = hx
    hs, cs = [], []
    for t in range(x_seq.shape[0]):
        h, c = _reference(params, x_seq[t], c_lists[t], (h, c))
        hs.append(h)
        cs.append(c)
    return jnp.stack(hs, 0), jnp.stack(cs, 0)


if __name__ == "__main__":
    input_size, hidden_size, max_c, T = 16, 32, 8, 8
    key = jax.random.PRNGKey(0)
    k_par, k_x, k_h, k_c, k_ci = jax.random.split(key, 5)

    params = init_params(k_par, input_size, hidden_size)
    h0 = jax.random.normal(k_h, (1, hidden_size), jnp.float32)
    c0 = jax.random.normal(k_c, (1, hidden_size), jnp.float32)

    # --- single-step, module-equivalent API (both branches, one compiled kernel)
    input_ = jax.random.normal(k_x, (1, input_size), jnp.float32)
    c_input = [jax.random.normal(jax.random.fold_in(k_ci, n),
                                 (1, hidden_size), jnp.float32) for n in range(3)]

    h1, c1 = multi_input_lstm_cell(params, input_, c_input, (h0, c0), max_c=max_c)
    jax.block_until_ready((h1, c1))
    h1_ref, c1_ref = _reference(params, input_, c_input, (h0, c0))
    assert jnp.allclose(h1, h1_ref, rtol=2e-5, atol=2e-5)
    assert jnp.allclose(c1, c1_ref, rtol=2e-5, atol=2e-5)

    h1b, c1b = multi_input_lstm_cell(params, input_, [], (h0, c0), max_c=max_c)
    jax.block_until_ready((h1b, c1b))
    h1b_ref, c1b_ref = _reference(params, input_, [], (h0, c0))
    assert jnp.allclose(h1b, h1b_ref, rtol=2e-5, atol=2e-5)
    assert jnp.allclose(c1b, c1b_ref, rtol=2e-5, atol=2e-5)

    # --- whole sequence inside one pallas_call (mixed c_num per step) ---------
    c_nums = [0, 3, 1, 0, 2, 5, 8, 0]
    x_seq = jax.random.normal(jax.random.fold_in(k_x, 1),
                              (T, 1, input_size), jnp.float32)
    c_lists = []
    c_pad_seq = jnp.zeros((T, max_c, hidden_size), jnp.float32)
    for t, n in enumerate(c_nums):
        lst = [jax.random.normal(jax.random.fold_in(k_ci, 100 * t + j),
                                 (1, hidden_size), jnp.float32) for j in range(n)]
        c_lists.append(lst)
        if n:
            c_pad_seq = c_pad_seq.at[t, :n, :].set(jnp.concatenate(lst, axis=0))
    c_num_seq = jnp.array(c_nums, jnp.int32)

    h_seq, c_seq = multi_input_lstm_sequence(params, x_seq, c_pad_seq,
                                             c_num_seq, h0, c0)
    jax.block_until_ready((h_seq, c_seq))

    h_seq_ref, c_seq_ref = _reference_sequence(params, x_seq, c_lists, (h0, c0))
    assert jnp.allclose(h_seq, h_seq_ref, rtol=1e-4, atol=1e-4)
    assert jnp.allclose(c_seq, c_seq_ref, rtol=1e-4, atol=1e-4)

    print("KERNEL_OK")
</pallas_src>

<mosaic_0001>
module attributes {stable_mosaic.version = 11 : i64} {
  func.func @_lattice_lstm_seq_kernel(%arg0: i32, %arg1: memref<1xi32, #tpu.memory_space<smem>>, %arg2: memref<1x1x16xf32, #tpu.memory_space<vmem>>, %arg3: memref<1x8x32xf32, #tpu.memory_space<vmem>>, %arg4: memref<1x32xf32, #tpu.memory_space<vmem>>, %arg5: memref<1x32xf32, #tpu.memory_space<vmem>>, %arg6: memref<16x128xf32, #tpu.memory_space<vmem>>, %arg7: memref<32x128xf32, #tpu.memory_space<vmem>>, %arg8: memref<1x128xf32, #tpu.memory_space<vmem>>, %arg9: memref<32x32xf32, #tpu.memory_space<vmem>>, %arg10: memref<1x1x32xf32, #tpu.memory_space<vmem>>, %arg11: memref<1x1x32xf32, #tpu.memory_space<vmem>>, %arg12: memref<1x32xf32, #tpu.memory_space<vmem>>, %arg13: memref<1x32xf32, #tpu.memory_space<vmem>>) attributes {dimension_semantics = [#tpu.dimension_semantics<arbitrary>], iteration_bounds = array<i64: 1>, scalar_prefetch = 1 : i64, scratch_operands = 2 : i64, tpu.core_type = #tpu.core_type<tc>, window_params = [{transform_indices = @transform_0, window_bounds = array<i64: 1, 1, 16>}, {transform_indices = @transform_1, window_bounds = array<i64: 1, 8, 32>}, {pipeline_mode = #tpu.pipeline_mode<synchronous>, transform_indices = @transform_2, window_bounds = array<i64: 1, 32>}, {pipeline_mode = #tpu.pipeline_mode<synchronous>, transform_indices = @transform_3, window_bounds = array<i64: 1, 32>}, {pipeline_mode = #tpu.pipeline_mode<synchronous>, transform_indices = @transform_4, window_bounds = array<i64: 16, 128>}, {pipeline_mode = #tpu.pipeline_mode<synchronous>, transform_indices = @transform_5, window_bounds = array<i64: 32, 128>}, {pipeline_mode = #tpu.pipeline_mode<synchronous>, transform_indices = @transform_6, window_bounds = array<i64: 1, 128>}, {pipeline_mode = #tpu.pipeline_mode<synchronous>, transform_indices = @transform_7, window_bounds = array<i64: 32, 32>}, {transform_indices = @transform_8, window_bounds = array<i64: 1, 1, 32>}, {transform_indices = @transform_9, window_bounds = array<i64: 1, 1, 32>}]} {
    %c0_i32 = arith.constant 0 : i32
    %0 = arith.cmpi eq, %arg0, %c0_i32 : i32
    %1 = arith.extui %0 : i1 to i32
    %c0_i32_0 = arith.constant 0 : i32
    %2 = arith.cmpi ne, %1, %c0_i32_0 : i32
    scf.if %2 {
      %c0_37 = arith.constant 0 : index
      %c0_38 = arith.constant 0 : index
      %77 = vector.load %arg4[%c0_37, %c0_38] : memref<1x32xf32, #tpu.memory_space<vmem>>, vector<1x32xf32>
      %c0_39 = arith.constant 0 : index
      %c0_40 = arith.constant 0 : index
      %78 = vector.load %arg12[%c0_39, %c0_40] : memref<1x32xf32, #tpu.memory_space<vmem>>, vector<1x32xf32>
      tpu.vector_store %arg12[%c0_39, %c0_40], %77 {strides = array<i32>} : memref<1x32xf32, #tpu.memory_space<vmem>>, vector<1x32xf32>,
      %c0_41 = arith.constant 0 : index
      %c0_42 = arith.constant 0 : index
      %79 = vector.load %arg5[%c0_41, %c0_42] : memref<1x32xf32, #tpu.memory_space<vmem>>, vector<1x32xf32>
      %c0_43 = arith.constant 0 : index
      %c0_44 = arith.constant 0 : index
      %80 = vector.load %arg13[%c0_43, %c0_44] : memref<1x32xf32, #tpu.memory_space<vmem>>, vector<1x32xf32>
      tpu.vector_store %arg13[%c0_43, %c0_44], %79 {strides = array<i32>} : memref<1x32xf32, #tpu.memory_space<vmem>>, vector<1x32xf32>,
    } else {
    }
    %c0 = arith.constant 0 : index
    %c0_1 = arith.constant 0 : index
    %c0_2 = arith.constant 0 : index
    %3 = vector.load %arg2[%c0, %c0_1, %c0_2] : memref<1x1x16xf32, #tpu.memory_space<vmem>>, vector<1x1x16xf32>
    %4 = vector.shape_cast %3 : vector<1x1x16xf32> to vector<1x16xf32>
    %c0_3 = arith.constant 0 : index
    %c0_4 = arith.constant 0 : index
    %5 = vector.load %arg12[%c0_3, %c0_4] : memref<1x32xf32, #tpu.memory_space<vmem>>, vector<1x32xf32>
    %c0_5 = arith.constant 0 : index
    %c0_6 = arith.constant 0 : index
    %6 = vector.load %arg13[%c0_5, %c0_6] : memref<1x32xf32, #tpu.memory_space<vmem>>, vector<1x32xf32>
    %c0_7 = arith.constant 0 : index
    %c0_8 = arith.constant 0 : index
    %7 = vector.load %arg6[%c0_7, %c0_8] : memref<16x128xf32, #tpu.memory_space<vmem>>, vector<16x128xf32>
    %cst = arith.constant dense<0.000000e+00> : vector<1x128xf32>
    %8 = tpu.matmul %4, %7, %cst {dimension_numbers = #tpu.dot_dimension_numbers<[1], [0], [0], [1], [0, 0, 1, 1], [], []>} : vector<1x16xf32>, vector<16x128xf32>, vector<1x128xf32> -> vector<1x128xf32>
    %c0_9 = arith.constant 0 : index
    %c0_10 = arith.constant 0 : index
    %9 = vector.load %arg7[%c0_9, %c0_10] : memref<32x128xf32, #tpu.memory_space<vmem>>, vector<32x128xf32>
    %cst_11 = arith.constant dense<0.000000e+00> : vector<1x128xf32>
    %10 = tpu.matmul %5, %9, %cst_11 {dimension_numbers = #tpu.dot_dimension_numbers<[1], [0], [0], [1], [0, 0, 1, 1], [], []>} : vector<1x32xf32>, vector<32x128xf32>, vector<1x128xf32> -> vector<1x128xf32>
    %11 = arith.addf %8, %10 : vector<1x128xf32>
    %c0_12 = arith.constant 0 : index
    %c0_13 = arith.constant 0 : index
    %12 = vector.load %arg8[%c0_12, %c0_13] : memref<1x128xf32, #tpu.memory_space<vmem>>, vector<1x128xf32>
    %13 = arith.addf %11, %12 : vector<1x128xf32>
    %14 = vector.extract_strided_slice %13 {offsets = [0, 0], sizes = [1, 32], strides = [1, 1]} : vector<1x128xf32> to vector<1x32xf32>
    %15 = arith.negf %14 : vector<1x32xf32>
    %16 = math.exp %15 : vector<1x32xf32>
    %cst_14 = arith.constant 1.000000e+00 : f32
    %17 = vector.broadcast %cst_14 : f32 to vector<1x32xf32>
    %18 = arith.addf %17, %16 : vector<1x32xf32>
    %19 = arith.divf %17, %18 : vector<1x32xf32>
    %20 = vector.extract_strided_slice %13 {offsets = [0, 32], sizes = [1, 32], strides = [1, 1]} : vector<1x128xf32> to vector<1x32xf32>
    %21 = arith.negf %20 : vector<1x32xf32>
    %22 = math.exp %21 : vector<1x32xf32>
    %cst_15 = arith.constant 1.000000e+00 : f32
    %23 = vector.broadcast %cst_15 : f32 to vector<1x32xf32>
    %24 = arith.addf %23, %22 : vector<1x32xf32>
    %25 = arith.divf %23, %24 : vector<1x32xf32>
    %26 = vector.extract_strided_slice %13 {offsets = [0, 64], sizes = [1, 32], strides = [1, 1]} : vector<1x128xf32> to vector<1x32xf32>
    %27 = math.tanh %26 : vector<1x32xf32>
    %28 = vector.extract_strided_slice %13 {offsets = [0, 96], sizes = [1, 32], strides = [1, 1]} : vector<1x128xf32> to vector<1x32xf32>
    %c0_16 = arith.constant 0 : index
    %c0_17 = arith.constant 0 : index
    %c0_18 = arith.constant 0 : index
    %29 = vector.load %arg3[%c0_16, %c0_17, %c0_18] : memref<1x8x32xf32, #tpu.memory_space<vmem>>, vector<1x8x32xf32>
    %30 = vector.shape_cast %29 : vector<1x8x32xf32> to vector<8x32xf32>
    %c0_19 = arith.constant 0 : index
    %c0_20 = arith.constant 0 : index
    %31 = vector.load %arg9[%c0_19, %c0_20] : memref<32x32xf32, #tpu.memory_space<vmem>>, vector<32x32xf32>
    %cst_21 = arith.constant dense<0.000000e+00> : vector<8x32xf32>
    %32 = tpu.matmul %30, %31, %cst_21 {dimension_numbers = #tpu.dot_dimension_numbers<[1], [0], [0], [1], [0, 0, 1, 1], [], []>} : vector<8x32xf32>, vector<32x32xf32>, vector<8x32xf32> -> vector<8x32xf32>
    %33 = vector.broadcast %28 : vector<1x32xf32> to vector<8x32xf32>
    %34 = arith.addf %33, %32 : vector<8x32xf32>
    %35 = arith.negf %34 : vector<8x32xf32>
    %36 = math.exp %35 : vector<8x32xf32>
    %cst_22 = arith.constant 1.000000e+00 : f32
    %37 = vector.broadcast %cst_22 : f32 to vector<8x32xf32>
    %38 = arith.addf %37, %36 : vector<8x32xf32>
    %39 = arith.divf %37, %38 : vector<8x32xf32>
    %40 = arith.index_cast %arg0 : i32 to index
    %41 = memref.load %arg1[%40] : memref<1xi32, #tpu.memory_space<smem>>
    %42 = tpu.iota {dimensions = array<i32: 0>} : vector<8x32xi32>
    %43 = vector.broadcast %41 : i32 to vector<8x32xi32>
    %44 = arith.cmpi slt, %42, %43 : vector<8x32xi32>
    %45 = arith.extui %44 : vector<8x32xi1> to vector<8x32xi32>
    %46 = arith.sitofp %45 : vector<8x32xi32> to vector<8x32xf32>
    %47 = math.exp %19 : vector<1x32xf32>
    %48 = math.exp %39 : vector<8x32xf32>
    %49 = arith.mulf %48, %46 : vector<8x32xf32>
    %cst_23 = arith.constant dense<0.000000e+00> : vector<32xf32>
    %50 = vector.multi_reduction <add>, %49, %cst_23 [0] : vector<8x32xf32> to vector<32xf32>
    %51 = vector.shape_cast %50 : vector<32xf32> to vector<1x32xf32>
    %52 = arith.addf %47, %51 : vector<1x32xf32>
    %53 = arith.mulf %47, %27 : vector<1x32xf32>
    %54 = arith.mulf %49, %30 : vector<8x32xf32>
    %cst_24 = arith.constant dense<0.000000e+00> : vector<32xf32>
    %55 = vector.multi_reduction <add>, %54, %cst_24 [0] : vector<8x32xf32> to vector<32xf32>
    %56 = vector.shape_cast %55 : vector<32xf32> to vector<1x32xf32>
    %57 = arith.addf %53, %56 : vector<1x32xf32>
    %58 = tpu.reciprocal %52 : vector<1x32xf32> -> vector<1x32xf32>
    %59 = arith.mulf %57, %58 : vector<1x32xf32>
    %cst_25 = arith.constant 1.000000e+00 : f32
    %60 = vector.broadcast %cst_25 : f32 to vector<1x32xf32>
    %61 = arith.subf %60, %19 : vector<1x32xf32>
    %62 = arith.mulf %61, %6 : vector<1x32xf32>
    %63 = arith.mulf %19, %27 : vector<1x32xf32>
    %64 = arith.addf %62, %63 : vector<1x32xf32>
    %c0_i32_26 = arith.constant 0 : i32
    %65 = arith.cmpi sgt, %41, %c0_i32_26 : i32
    %66 = arith.select %65, %59, %64 : vector<1x32xf32>
    %67 = math.tanh %66 : vector<1x32xf32>
    %68 = arith.mulf %25, %67 : vector<1x32xf32>
    %c0_27 = arith.constant 0 : index
    %c0_28 = arith.constant 0 : index
    %69 = vector.load %arg12[%c0_27, %c0_28] : memref<1x32xf32, #tpu.memory_space<vmem>>, vector<1x32xf32>
    tpu.vector_store %arg12[%c0_27, %c0_28], %68 {strides = array<i32>} : memref<1x32xf32, #tpu.memory_space<vmem>>, vector<1x32xf32>,
    %c0_29 = arith.constant 0 : index
    %c0_30 = arith.constant 0 : index
    %70 = vector.load %arg13[%c0_29, %c0_30] : memref<1x32xf32, #tpu.memory_space<vmem>>, vector<1x32xf32>
    tpu.vector_store %arg13[%c0_29, %c0_30], %66 {strides = array<i32>} : memref<1x32xf32, #tpu.memory_space<vmem>>, vector<1x32xf32>,
    %c0_31 = arith.constant 0 : index
    %c0_32 = arith.constant 0 : index
    %c0_33 = arith.constant 0 : index
    %71 = vector.load %arg10[%c0_31, %c0_32, %c0_33] : memref<1x1x32xf32, #tpu.memory_space<vmem>>, vector<1x1x32xf32>
    %72 = vector.shape_cast %71 : vector<1x1x32xf32> to vector<1x32xf32>
    %73 = vector.shape_cast %68 : vector<1x32xf32> to vector<1x1x32xf32>
    tpu.vector_store %arg10[%c0_31, %c0_32, %c0_33], %73 {strides = array<i32>} : memref<1x1x32xf32, #tpu.memory_space<vmem>>, vector<1x1x32xf32>,
    %c0_34 = arith.constant 0 : index
    %c0_35 = arith.constant 0 : index
    %c0_36 = arith.constant 0 : index
    %74 = vector.load %arg11[%c0_34, %c0_35, %c0_36] : memref<1x1x32xf32, #tpu.memory_space<vmem>>, vector<1x1x32xf32>
    %75 = vector.shape_cast %74 : vector<1x1x32xf32> to vector<1x32xf32>
    %76 = vector.shape_cast %66 : vector<1x32xf32> to vector<1x1x32xf32>
    tpu.vector_store %arg11[%c0_34, %c0_35, %c0_36], %76 {strides = array<i32>} : memref<1x1x32xf32, #tpu.memory_space<vmem>>, vector<1x1x32xf32>,
    return
  }
  func.func @transform_0(%arg0: i32, %arg1: memref<1xi32, #tpu.memory_space<smem>>) -> (i32, i32, i32) {
    %c0_i32 = arith.constant 0 : i32
    %c0_i32_0 = arith.constant 0 : i32
    %c0_i32_1 = arith.constant 0 : i32
    return %arg0, %c0_i32, %c0_i32_0 : i32, i32, i32
  }
  func.func @transform_1(%arg0: i32, %arg1: memref<1xi32, #tpu.memory_space<smem>>) -> (i32, i32, i32) {
    %c0_i32 = arith.constant 0 : i32
    %c0_i32_0 = arith.constant 0 : i32
    %c0_i32_1 = arith.constant 0 : i32
    return %arg0, %c0_i32, %c0_i32_0 : i32, i32, i32
  }
  func.func @transform_2(%arg0: i32, %arg1: memref<1xi32, #tpu.memory_space<smem>>) -> (i32, i32) {
    %c0_i32 = arith.constant 0 : i32
    %c0_i32_0 = arith.constant 0 : i32
    %c0_i32_1 = arith.constant 0 : i32
    return %c0_i32, %c0_i32_0 : i32, i32
  }
  func.func @transform_3(%arg0: i32, %arg1: memref<1xi32, #tpu.memory_space<smem>>) -> (i32, i32) {
    %c0_i32 = arith.constant 0 : i32
    %c0_i32_0 = arith.constant 0 : i32
    %c0_i32_1 = arith.constant 0 : i32
    return %c0_i32, %c0_i32_0 : i32, i32
  }
  func.func @transform_4(%arg0: i32, %arg1: memref<1xi32, #tpu.memory_space<smem>>) -> (i32, i32) {
    %c0_i32 = arith.constant 0 : i32
    %c0_i32_0 = arith.constant 0 : i32
    %c0_i32_1 = arith.constant 0 : i32
    return %c0_i32, %c0_i32_0 : i32, i32
  }
  func.func @transform_5(%arg0: i32, %arg1: memref<1xi32, #tpu.memory_space<smem>>) -> (i32, i32) {
    %c0_i32 = arith.constant 0 : i32
    %c0_i32_0 = arith.constant 0 : i32
    %c0_i32_1 = arith.constant 0 : i32
    return %c0_i32, %c0_i32_0 : i32, i32
  }
  func.func @transform_6(%arg0: i32, %arg1: memref<1xi32, #tpu.memory_space<smem>>) -> (i32, i32) {
    %c0_i32 = arith.constant 0 : i32
    %c0_i32_0 = arith.constant 0 : i32
    %c0_i32_1 = arith.constant 0 : i32
    return %c0_i32, %c0_i32_0 : i32, i32
  }
  func.func @transform_7(%arg0: i32, %arg1: memref<1xi32, #tpu.memory_space<smem>>) -> (i32, i32) {
    %c0_i32 = arith.constant 0 : i32
    %c0_i32_0 = arith.constant 0 : i32
    %c0_i32_1 = arith.constant 0 : i32
    return %c0_i32, %c0_i32_0 : i32, i32
  }
  func.func @transform_8(%arg0: i32, %arg1: memref<1xi32, #tpu.memory_space<smem>>) -> (i32, i32, i32) {
    %c0_i32 = arith.constant 0 : i32
    %c0_i32_0 = arith.constant 0 : i32
    %c0_i32_1 = arith.constant 0 : i32
    return %arg0, %c0_i32, %c0_i32_0 : i32, i32, i32
  }
  func.func @transform_9(%arg0: i32, %arg1: memref<1xi32, #tpu.memory_space<smem>>) -> (i32, i32, i32) {
    %c0_i32 = arith.constant 0 : i32
    %c0_i32_0 = arith.constant 0 : i32
    %c0_i32_1 = arith.constant 0 : i32
    return %arg0, %c0_i32, %c0_i32_0 : i32, i32, i32
  }
}

</mosaic_0001>

<llo_original>
// kernel: tpu_custom_call.1
$region0: #{tpu_custom_call.1}
  #allocation0 [shape = 'u32[]', space=smem, size = 0x4, offset = 0x4, fixed_abs, tag = 'smem constant byte address 0x4 - core index']
  #allocation1 [shape = 'u32[144,128]{1,0:T(1,128)}', space=vmem, size = 0x12000, scoped, tag = 'internal scratch']
  #allocation2 [shape = 'f32[1,32]{1,0:T(1,128)}', space=vmem, size = 0x200, scoped, tag = 'scratch operand']
  #allocation3 [shape = 'f32[1,32]{1,0:T(1,128)}', space=vmem, size = 0x200, scoped, tag = 'scratch operand']
  #allocation4 [shape = 's32[1]{0}', space=sflag, size = 0x4, scoped, tag = 'scoped memory for tpu_custom_call.1']
  #allocation5 [shape = 's32[1]{0:T(128)S(6)}', space=smem, size = 0x200, scoped, tag = 'prefetched SMEM operand 0']
  %s0 = inlined_call_operand.<no memory space> [shape: s32[1], index: 0, kind: input, shape index: {}]
  %s1 = inlined_call_operand.vmem [shape: f32[1,1,16], index: 1, kind: input, shape index: {}]
  %s2 = inlined_call_operand.hbm [shape: f32[1,8,32], index: 2, kind: input, shape index: {}]
  %s3 = inlined_call_operand.vmem [shape: f32[1,32], index: 3, kind: input, shape index: {}]
  %s4 = inlined_call_operand.hbm [shape: f32[1,32], index: 4, kind: input, shape index: {}]
  %s5 = inlined_call_operand.vmem [shape: f32[16,128], index: 5, kind: input, shape index: {}]
  %s6 = inlined_call_operand.hbm [shape: f32[32,128], index: 6, kind: input, shape index: {}]
  %s7 = inlined_call_operand.vmem [shape: f32[1,128], index: 7, kind: input, shape index: {}]
  %s8 = inlined_call_operand.hbm [shape: f32[32,32], index: 8, kind: input, shape index: {}]
  %s9 = inlined_call_operand.hbm [shape: f32[1,1,32], index: 9, kind: output, shape index: {0}]
  %s10 = inlined_call_operand.hbm [shape: f32[1,1,32], index: 10, kind: output, shape index: {1}]
  %11 = xla_tuple %s9, %s10
  %s12 = sld [smem:[#allocation0]]
  $region70: #{tpu_custom_call.1} parent=0
    _
  %s14 = ssub.s32 1, %s12
  %s15 = scalar_select 0, %s14, %s12
  %16 = sst [smem:[#allocation5]] %s0
  $region1: #{tpu_custom_call.1} parent=0
    #allocation6 [shape = 'u8[4096]{0}', space=vmem, size = 0x1000, scoped, tag = 'input window, operand 2, single buffered']
    #allocation7 [shape = 's32[1]{0}', space=sflag, size = 0x4, scoped, tag = 'scoped memory for tpu_custom_call.1']
    #allocation8 [shape = 's32[1]{0}', space=sflag, size = 0x4, scoped, tag = 'scoped memory for tpu_custom_call.1']
    #allocation9 [shape = 'u8[512]{0}', space=vmem, size = 0x400, scoped, tag = 'input window, operand 4, single buffered']
    #allocation10 [shape = 's32[1]{0}', space=sflag, size = 0x4, scoped, tag = 'scoped memory for tpu_custom_call.1']
    #allocation11 [shape = 'u8[16384]{0}', space=vmem, size = 0x4000, scoped, tag = 'input window, operand 6, single buffered']
    #allocation12 [shape = 'u8[16384]{0}', space=vmem, size = 0x4000, scoped, tag = 'input window, operand 8, single buffered']
    #allocation13 [shape = 's32[1]{0}', space=sflag, size = 0x4, scoped, tag = 'scoped memory for tpu_custom_call.1']
    #allocation14 [shape = 'u8[512]{0}', space=vmem, size = 0x400, scoped, tag = 'output window, operand 0, single buffered']
    #allocation15 [shape = 'u8[512]{0}', space=vmem, size = 0x400, scoped, tag = 'output window, operand 1, single buffered']
    #allocation16 [shape = 's32[1]{0}', space=sflag, size = 0x4, scoped, tag = 'scoped memory for tpu_custom_call.1']
    %17 = vsyncpa [#allocation7], 0
    %18 = vsyncpa [#allocation10], 0
    %19 = vsyncpa [#allocation13], 0
    %20 = vsyncpa [#allocation8], 0
    %21 = vsyncpa [#allocation16], 0
    // Predicated region
    $region2: #{tpu_custom_call.1} parent=1 // pred_check
      _
    $region3: #{tpu_custom_call.1} parent=1 // pred_check_branch
      %23 = sbr.rel (0) target = $region5
    $region4: #{tpu_custom_call.1} parent=1 // pred_region
      _
    $region5: #{tpu_custom_call.1} parent=1 // pred_fallthru
      _
    // Predicated region
    $region6: #{tpu_custom_call.1} parent=1 // pred_check
      _
    $region7: #{tpu_custom_call.1} parent=1 // pred_check_branch
      %25 = sbr.rel (0) target = $region9
    $region8: #{tpu_custom_call.1} parent=1 // pred_region
      %s27 = ssub.s32 128, 128
      %28 = vsyncadd [#allocation7], %s27
      %s30 = sshll.u32 [#allocation6], 4
      %s31 = int_to_ptr.vmem [resolvable:$true] %s30
      %33 = dma.hbm_to_vmem [thread:$0]  %s2, 128, %s31, [#allocation7]
    $region9: #{tpu_custom_call.1} parent=1 // pred_fallthru
      _
    // Predicated region
    $region10: #{tpu_custom_call.1} parent=1 // pred_check
      _
    $region11: #{tpu_custom_call.1} parent=1 // pred_check_branch
      %35 = sbr.rel (0) target = $region13
    $region12: #{tpu_custom_call.1} parent=1 // pred_region
      _
    $region13: #{tpu_custom_call.1} parent=1 // pred_fallthru
      _
    // Predicated region
    $region14: #{tpu_custom_call.1} parent=1 // pred_check
      _
    $region15: #{tpu_custom_call.1} parent=1 // pred_check_branch
      %37 = sbr.rel (0) target = $region17
    $region16: #{tpu_custom_call.1} parent=1 // pred_region
      %s39 = ssub.s32 16, 16
      %40 = vsyncadd [#allocation10], %s39
      %s42 = sshll.u32 [#allocation9], 4
      %s43 = int_to_ptr.vmem [resolvable:$true] %s42
      %45 = dma.hbm_to_vmem [thread:$0]  %s4, 16, %s43, [#allocation10]
    $region17: #{tpu_custom_call.1} parent=1 // pred_fallthru
      _
    // Predicated region
    $region18: #{tpu_custom_call.1} parent=1 // pred_check
      _
    $region19: #{tpu_custom_call.1} parent=1 // pred_check_branch
      %47 = sbr.rel (0) target = $region21
    $region20: #{tpu_custom_call.1} parent=1 // pred_region
      _
    $region21: #{tpu_custom_call.1} parent=1 // pred_fallthru
      _
    // Predicated region
    $region22: #{tpu_custom_call.1} parent=1 // pred_check
      _
    $region23: #{tpu_custom_call.1} parent=1 // pred_check_branch
      %49 = sbr.rel (0) target = $region25
    $region24: #{tpu_custom_call.1} parent=1 // pred_region
      %s51 = ssub.s32 512, 512
      %52 = vsyncadd [#allocation10], %s51
      %s53 = sshll.u32 [#allocation11], 4
      %s54 = int_to_ptr.vmem [resolvable:$true] %s53
      %59 = dma.hbm_to_vmem [thread:$0]  %s6, 512, %s54, [#allocation10], 128, 128, 8
    $region25: #{tpu_custom_call.1} parent=1 // pred_fallthru
      _
    // Predicated region
    $region26: #{tpu_custom_call.1} parent=1 // pred_check
      _
    $region27: #{tpu_custom_call.1} parent=1 // pred_check_branch
      %61 = sbr.rel (0) target = $region29
    $region28: #{tpu_custom_call.1} parent=1 // pred_region
      _
    $region29: #{tpu_custom_call.1} parent=1 // pred_fallthru
      _
    // Predicated region
    $region30: #{tpu_custom_call.1} parent=1 // pred_check
      _
    $region31: #{tpu_custom_call.1} parent=1 // pred_check_branch
      %63 = sbr.rel (0) target = $region33
    $region32: #{tpu_custom_call.1} parent=1 // pred_region
      %s65 = ssub.s32 512, 512
      %66 = vsyncadd [#allocation13], %s65
      %s67 = sshll.u32 [#allocation12], 4
      %s68 = int_to_ptr.vmem [resolvable:$true] %s67
      %73 = dma.hbm_to_vmem [thread:$0]  %s8, 512, %s68, [#allocation13], 128, 128, 8
    $region33: #{tpu_custom_call.1} parent=1 // pred_fallthru
      _
    // Predicated region
    $region34: #{tpu_custom_call.1} parent=1 // pred_check
      _
    $region35: #{tpu_custom_call.1} parent=1 // pred_check_branch
      %75 = sbr.rel (0) target = $region37
    $region36: #{tpu_custom_call.1} parent=1 // pred_region
      %76 = dma.done [#allocation7], 128
    $region37: #{tpu_custom_call.1} parent=1 // pred_fallthru
      _
    // Predicated region
    $region38: #{tpu_custom_call.1} parent=1 // pred_check
      _
    $region39: #{tpu_custom_call.1} parent=1 // pred_check_branch
      %78 = sbr.rel (0) target = $region41
    $region40: #{tpu_custom_call.1} parent=1 // pred_region
      %79 = dma.done [#allocation10], 16
    $region41: #{tpu_custom_call.1} parent=1 // pred_fallthru
      _
    // Predicated region
    $region42: #{tpu_custom_call.1} parent=1 // pred_check
      _
    $region43: #{tpu_custom_call.1} parent=1 // pred_check_branch
      %81 = sbr.rel (0) target = $region45
    $region44: #{tpu_custom_call.1} parent=1 // pred_region
      %82 = dma.done [#allocation10], 512
    $region45: #{tpu_custom_call.1} parent=1 // pred_fallthru
      _
    // Predicated region
    $region46: #{tpu_custom_call.1} parent=1 // pred_check
      _
    $region47: #{tpu_custom_call.1} parent=1 // pred_check_branch
      %84 = sbr.rel (0) target = $region49
    $region48: #{tpu_custom_call.1} parent=1 // pred_region
      %85 = dma.done [#allocation13], 512
    $region49: #{tpu_custom_call.1} parent=1 // pred_fallthru
      _
    %p86 = scmp.eq.s32.totalorder 0, 0
    // Predicated region
    $region50: #{tpu_custom_call.1} parent=1 // pred_check
      %p87 = pneg %p86
    $region51: #{tpu_custom_call.1} parent=1 // pred_check_branch
      %89 = sbr.rel (%p87) target = $region53
    $region52: #{tpu_custom_call.1} parent=1 // pred_region
      %v90 = vld [vmem:[%s3] sm:$0x1]
      %vm91 = vcmask 253952
      %92 = vst.msk [vmem:[#allocation2] sm:$0x1] %vm91, %v90
      %v93 = vld [vmem:[#allocation9] sm:$0x1]
      %94 = vst.msk [vmem:[#allocation3] sm:$0x1] %vm91, %v93
    $region53: #{tpu_custom_call.1} parent=1 // pred_fallthru
      _
    %v95 = vld [vmem:[%s1] sm:$0x1]
    %v96 = vld [vmem:[#allocation2] sm:$0x1]
    %v97 = vld [vmem:[#allocation3] sm:$0x1]
    %v98 = vld [vmem:[%s5] sm:$0xff]
    %v99 = vld [vmem:[%s5 + $0x8] sm:$0xff]
    %v100 = vld [vmem:[#allocation11] sm:$0xff]
    %v101 = vld [vmem:[#allocation11 + $0x8] sm:$0xff]
    %v102 = vld [vmem:[#allocation11 + $0x10] sm:$0xff]
    %v103 = vld [vmem:[#allocation11 + $0x18] sm:$0xff]
    %vm104 = vcmask 261120
    %v106 = vsel %vm104, %v96, 0
    %108 = vmatprep.subr.mxu0 0.0
    %109 = vmatpush1.msra.mxu0 %v100
    %110 = vmatprep.subr.mxu0 0.0
    %111 = vmatpush1.msra.mxu0 %v101
    %112 = vmatprep.subr.mxu0 0.0
    %113 = vmatpush1.msra.mxu0 %v102
    %114 = vmatprep.subr.mxu0 0.0
    %115 = vmatpush1.msra.mxu0 %v103
    %116 = vmatprep.subr.mxu0 0.0
    %117 = vmatpush1.msra.mxu0 0.0
    %118 = vmatprep.subr.mxu0 0.0
    %119 = vmatpush1.msra.mxu0 0.0
    %120 = vmatprep.subr.mxu0 0.0
    %121 = vmatpush1.msra.mxu0 0.0
    %122 = vmatprep.subr.mxu0 0.0
    %123 = vmatpush1.msra.mxu0 0.0
    %124 = vmatprep.subr.mxu0 0.0
    %125 = vmatpush1.msra.mxu0 0.0
    %126 = vmatprep.subr.mxu0 0.0
    %127 = vmatpush1.msra.mxu0 0.0
    %128 = vmatprep.subr.mxu0 0.0
    %129 = vmatpush1.msra.mxu0 0.0
    %130 = vmatprep.subr.mxu0 0.0
    %131 = vmatpush1.msra.mxu0 0.0
    %132 = vmatprep.subr.mxu0 0.0
    %133 = vmatpush1.msra.mxu0 0.0
    %134 = vmatprep.subr.mxu0 0.0
    %135 = vmatpush1.msra.mxu0 0.0
    %136 = vmatprep.subr.mxu0 0.0
    %137 = vmatpush1.msra.mxu0 0.0
    %138 = vmatprep.subr.mxu0 0.0
    %139 = vmatpush1.msra.mxu0 0.0
    %140 = vmatprep.subr.mxu0 0.0
    %141 = vmatpush1.msra.mxu0 0.0
    %142 = vmatprep.subr.mxu0 0.0
    %143 = vmatpush1.msra.mxu0 0.0
    %144 = vmatprep.subr.mxu0 0.0
    %145 = vmatpush1.msra.mxu0 0.0
    %146 = vmatprep.subr.mxu0 0.0
    %147 = vmatpush1.msra.mxu0 0.0
    %148 = vmatprep.subr.mxu0 0.0
    %149 = vmatpush1.msra.mxu0 0.0
    %150 = vmatprep.subr.mxu0 0.0
    %151 = vmatpush1.msra.mxu0 0.0
    %152 = vmatprep.subr.mxu0 0.0
    %153 = vmatpush1.msra.mxu0 0.0
    %154 = vmatprep.subr.mxu0 0.0
    %155 = vmatpush1.msra.mxu0 0.0
    %156 = vmatprep.subr.mxu0 0.0
    %157 = vmatpush1.msra.mxu0 0.0
    %158 = vmatprep.subr.mxu0 0.0
    %159 = vmatpush1.msra.mxu0 0.0
    %160 = vmatprep.subr.mxu0 0.0
    %161 = vmatpush1.msra.mxu0 0.0
    %162 = vmatprep.subr.mxu0 0.0
    %163 = vmatpush1.msra.mxu0 0.0
    %164 = vmatprep.subr.mxu0 0.0
    %165 = vmatpush1.msra.mxu0 0.0
    %166 = vmatprep.subr.mxu0 0.0
    %167 = vmatpush1.msra.mxu0 0.0
    %168 = vmatprep.subr.mxu0 0.0
    %169 = vmatpush1.msra.mxu0 0.0
    %170 = vmatprep.subr.mxu0 0.0
    %171 = vmatpush1.msra.mxu0 0.0
    %172 = vmatprep.mubr.f32.mxu0 0.0
    %173 = vmatmul.mubr.f32.gmra.mrb[0].mxu0 %v106
    %v174 = vpop.f32.mrb[0].mxu0
    %v175 = vadd.f32 0.0, %v174
    %v176 = vpop.f32.mrb[0].mxu0
    %177 = vdwg.mxu0
    %vm178 = vcmask 130048
    %v180 = vsel %vm178, %v95, 0
    %182 = vmatprep.subr.mxu0 0.0
    %183 = vmatpush1.msra.mxu0 %v98
    %184 = vmatprep.subr.mxu0 0.0
    %185 = vmatpush1.msra.mxu0 %v99
    %186 = vmatprep.subr.mxu0 0.0
    %187 = vmatpush1.msra.mxu0 0.0
    %188 = vmatprep.subr.mxu0 0.0
    %189 = vmatpush1.msra.mxu0 0.0
    %190 = vmatprep.subr.mxu0 0.0
    %191 = vmatpush1.msra.mxu0 0.0
    %192 = vmatprep.subr.mxu0 0.0
    %193 = vmatpush1.msra.mxu0 0.0
    %194 = vmatprep.subr.mxu0 0.0
    %195 = vmatpush1.msra.mxu0 0.0
    %196 = vmatprep.subr.mxu0 0.0
    %197 = vmatpush1.msra.mxu0 0.0
    %198 = vmatprep.subr.mxu0 0.0
    %199 = vmatpush1.msra.mxu0 0.0
    %200 = vmatprep.subr.mxu0 0.0
    %201 = vmatpush1.msra.mxu0 0.0
    %202 = vmatprep.subr.mxu0 0.0
    %203 = vmatpush1.msra.mxu0 0.0
    %204 = vmatprep.subr.mxu0 0.0
    %205 = vmatpush1.msra.mxu0 0.0
    %206 = vmatprep.subr.mxu0 0.0
    %207 = vmatpush1.msra.mxu0 0.0
    %208 = vmatprep.subr.mxu0 0.0
    %209 = vmatpush1.msra.mxu0 0.0
    %210 = vmatprep.subr.mxu0 0.0
    %211 = vmatpush1.msra.mxu0 0.0
    %212 = vmatprep.subr.mxu0 0.0
    %213 = vmatpush1.msra.mxu0 0.0
    %214 = vmatprep.subr.mxu0 0.0
    %215 = vmatpush1.msra.mxu0 0.0
    %216 = vmatprep.subr.mxu0 0.0
    %217 = vmatpush1.msra.mxu0 0.0
    %218 = vmatprep.subr.mxu0 0.0
    %219 = vmatpush1.msra.mxu0 0.0
    %220 = vmatprep.subr.mxu0 0.0
    %221 = vmatpush1.msra.mxu0 0.0
    %222 = vmatprep.subr.mxu0 0.0
    %223 = vmatpush1.msra.mxu0 0.0
    %224 = vmatprep.subr.mxu0 0.0
    %225 = vmatpush1.msra.mxu0 0.0
    %226 = vmatprep.subr.mxu0 0.0
    %227 = vmatpush1.msra.mxu0 0.0
    %228 = vmatprep.subr.mxu0 0.0
    %229 = vmatpush1.msra.mxu0 0.0
    %230 = vmatprep.subr.mxu0 0.0
    %231 = vmatpush1.msra.mxu0 0.0
    %232 = vmatprep.subr.mxu0 0.0
    %233 = vmatpush1.msra.mxu0 0.0
    %234 = vmatprep.subr.mxu0 0.0
    %235 = vmatpush1.msra.mxu0 0.0
    %236 = vmatprep.subr.mxu0 0.0
    %237 = vmatpush1.msra.mxu0 0.0
    %238 = vmatprep.subr.mxu0 0.0
    %239 = vmatpush1.msra.mxu0 0.0
    %240 = vmatprep.subr.mxu0 0.0
    %241 = vmatpush1.msra.mxu0 0.0
    %242 = vmatprep.subr.mxu0 0.0
    %243 = vmatpush1.msra.mxu0 0.0
    %244 = vmatprep.subr.mxu0 0.0
    %245 = vmatpush1.msra.mxu0 0.0
    %246 = vmatprep.mubr.f32.mxu0 0.0
    %247 = vmatmul.mubr.f32.gmra.mrb[0].mxu0 %v180
    %v248 = vpop.f32.mrb[0].mxu0
    %v249 = vadd.f32 %v175, %v248
    %v250 = vpop.f32.mrb[0].mxu0
    %251 = vdwg.mxu0
    %v252 = vld [vmem:[%s7] sm:$0x1]
    %v253 = vadd.f32 %v249, %v252
    %v254 = vxor.u32 %v253, 2147483648
    %v255 = vmul.f32 %v254, 1.442695
    %v256 = vpow.pop %v255
    %v257 = vadd.f32 %v256, 1.0
    %v258 = vrcp.pop %v257
    %v259 = vmul.f32 1.0, %v258
    %v260 = vtanh.pop %v253
    %v261 = vld [vmem:[#allocation6] sm:$0xff]
    %v262 = vld [vmem:[#allocation12] sm:$0xff]
    %v263 = vld [vmem:[#allocation12 + $0x8] sm:$0xff]
    %v264 = vld [vmem:[#allocation12 + $0x10] sm:$0xff]
    %v265 = vld [vmem:[#allocation12 + $0x18] sm:$0xff]
    %v267 = vsel %vm104, %v261, 0
    %269 = vmatprep.subr.mxu0 0.0
    %270 = vmatpush1.msra.mxu0 %v262
    %271 = vmatprep.subr.mxu0 0.0
    %272 = vmatpush1.msra.mxu0 %v263
    %273 = vmatprep.subr.mxu0 0.0
    %274 = vmatpush1.msra.mxu0 %v264
    %275 = vmatprep.subr.mxu0 0.0
    %276 = vmatpush1.msra.mxu0 %v265
    %277 = vmatprep.subr.mxu0 0.0
    %278 = vmatpush1.msra.mxu0 0.0
    %279 = vmatprep.subr.mxu0 0.0
    %280 = vmatpush1.msra.mxu0 0.0
    %281 = vmatprep.subr.mxu0 0.0
    %282 = vmatpush1.msra.mxu0 0.0
    %283 = vmatprep.subr.mxu0 0.0
    %284 = vmatpush1.msra.mxu0 0.0
    %285 = vmatprep.subr.mxu0 0.0
    %286 = vmatpush1.msra.mxu0 0.0
    %287 = vmatprep.subr.mxu0 0.0
    %288 = vmatpush1.msra.mxu0 0.0
    %289 = vmatprep.subr.mxu0 0.0
    %290 = vmatpush1.msra.mxu0 0.0
    %291 = vmatprep.subr.mxu0 0.0
    %292 = vmatpush1.msra.mxu0 0.0
    %293 = vmatprep.subr.mxu0 0.0
    %294 = vmatpush1.msra.mxu0 0.0
    %295 = vmatprep.subr.mxu0 0.0
    %296 = vmatpush1.msra.mxu0 0.0
    %297 = vmatprep.subr.mxu0 0.0
    %298 = vmatpush1.msra.mxu0 0.0
    %299 = vmatprep.subr.mxu0 0.0
    %300 = vmatpush1.msra.mxu0 0.0
    %301 = vmatprep.subr.mxu0 0.0
    %302 = vmatpush1.msra.mxu0 0.0
    %303 = vmatprep.subr.mxu0 0.0
    %304 = vmatpush1.msra.mxu0 0.0
    %305 = vmatprep.subr.mxu0 0.0
    %306 = vmatpush1.msra.mxu0 0.0
    %307 = vmatprep.subr.mxu0 0.0
    %308 = vmatpush1.msra.mxu0 0.0
    %309 = vmatprep.subr.mxu0 0.0
    %310 = vmatpush1.msra.mxu0 0.0
    %311 = vmatprep.subr.mxu0 0.0
    %312 = vmatpush1.msra.mxu0 0.0
    %313 = vmatprep.subr.mxu0 0.0
    %314 = vmatpush1.msra.mxu0 0.0
    %315 = vmatprep.subr.mxu0 0.0
    %316 = vmatpush1.msra.mxu0 0.0
    %317 = vmatprep.subr.mxu0 0.0
    %318 = vmatpush1.msra.mxu0 0.0
    %319 = vmatprep.subr.mxu0 0.0
    %320 = vmatpush1.msra.mxu0 0.0
    %321 = vmatprep.subr.mxu0 0.0
    %322 = vmatpush1.msra.mxu0 0.0
    %323 = vmatprep.subr.mxu0 0.0
    %324 = vmatpush1.msra.mxu0 0.0
    %325 = vmatprep.subr.mxu0 0.0
    %326 = vmatpush1.msra.mxu0 0.0
    %327 = vmatprep.subr.mxu0 0.0
    %328 = vmatpush1.msra.mxu0 0.0
    %329 = vmatprep.subr.mxu0 0.0
    %330 = vmatpush1.msra.mxu0 0.0
    %331 = vmatprep.subr.mxu0 0.0
    %332 = vmatpush1.msra.mxu0 0.0
    %333 = vmatprep.mubr.f32.mxu0 0.0
    %334 = vmatmul.mubr.f32.gmra.mrb[0].mxu0 %v267
    %v335 = vpop.f32.mrb[0].mxu0
    %v336 = vadd.f32 0.0, %v335
    %v337 = vpop.f32.mrb[0].mxu0
    %338 = vdwg.mxu0
    %v339 = vlaneseq
    %v340 = vshrl.u32 %v339, 7
    %v341 = vsub.s32 0, %v340
    %v342 = vrot.slane %v253, %v341
    %344 = vrot.lane.b32.xlu0 %v336, 96
    %v345 = vpop.permute.xlu0 %344
    %v347 = vadd.f32 %v342, %v345
    %v348 = vxor.u32 %v347, 2147483648
    %v349 = vmul.f32 %v348, 1.442695
    %v350 = vpow.pop %v349
    %v351 = vadd.f32 %v350, 1.0
    %v352 = vrcp.pop %v351
    %v353 = vmul.f32 1.0, %v352
    %s354 = sld [smem:[#allocation5]]
    %v355 = vlaneseq
    %v356 = vshrl.u32 %v355, 7
    %v357 = vstv %s354
    %vm358 = vcmp.lt.s32.totalorder %v356, %v357
    %v359 = vsel %vm358, 1, 0
    %v360 = vcvt.s32.f32 %v359
    %v361 = vmul.f32 %v259, 1.442695
    %v362 = vpow.pop %v361
    %v363 = vmul.f32 %v353, 1.442695
    %v364 = vpow.pop %v363
    %v365 = vmul.f32 %v364, %v360
    %vm366 = vcmask 1048320
    %v367 = vsel %vm366, %v365, 0.0
    %v368 = vrot.slane %v367, 4
    %v369 = vadd.f32 %v367, %v368
    %v370 = vrot.slane %v369, 2
    %v371 = vadd.f32 %v369, %v370
    %v372 = vrot.slane %v371, 1
    %v373 = vadd.f32 %v371, %v372
    %375 = vrot.lane.b32.xlu0 %v373, 32
    %v376 = vpop.permute.xlu0 %375
    %v378 = vadd.f32 %v362, %v376
    %380 = vrot.lane.b32.xlu0 %v260, 64
    %v381 = vpop.permute.xlu0 %380
    %v383 = vmul.f32 %v362, %v381
    %384 = vrot.lane.b32.xlu0 %v261, 96
    %v385 = vpop.permute.xlu0 %384
    %v387 = vmul.f32 %v365, %v385
    %v388 = vsel %vm366, %v387, 0.0
    %v389 = vrot.slane %v388, 4
    %v390 = vadd.f32 %v388, %v389
    %v391 = vrot.slane %v390, 2
    %v392 = vadd.f32 %v390, %v391
    %v393 = vrot.slane %v392, 1
    %v394 = vadd.f32 %v392, %v393
    %396 = vrot.lane.b32.xlu0 %v394, 32
    %v397 = vpop.permute.xlu0 %396
    %v399 = vadd.f32 %v383, %v397
    %v400 = vrcp.pop %v378
    %v401 = vmul.f32 %v399, %v400
    %v402 = vsub.f32 1.0, %v259
    %v403 = vmul.f32 %v402, %v97
    %v404 = vmul.f32 %v259, %v381
    %v405 = vadd.f32 %v403, %v404
    %p406 = scmp.gt.s32.totalorder %s354, 0
    %s407 = scalar_select %p406, 1, 0
    %v408 = vstv %s407
    %vm409 = vcmp.eq.s32.totalorder %v408, 1
    %v410 = vsel %vm409, %v401, %v405
    %v411 = vtanh.pop %v410
    %413 = vrot.lane.b32.xlu0 %v411, 32
    %v414 = vpop.permute.xlu0 %413
    %v416 = vmul.f32 %v259, %v414
    %418 = vrot.lane.b32.xlu0 %v416, 96
    %v419 = vpop.permute.xlu0 %418
    %vm421 = vcmask 253952
    %422 = vst.msk [vmem:[#allocation2] sm:$0x1] %vm421, %v419
    %423 = vst.msk [vmem:[#allocation3] sm:$0x1] %vm421, %v410
    %424 = vst.msk [vmem:[#allocation14] sm:$0x1] %vm421, %v419
    %425 = vst.msk [vmem:[#allocation15] sm:$0x1] %vm421, %v410
    // Predicated region
    $region54: #{tpu_custom_call.1} parent=1 // pred_check
      _
    $region55: #{tpu_custom_call.1} parent=1 // pred_check_branch
      %427 = sbr.rel (0) target = $region57
    $region56: #{tpu_custom_call.1} parent=1 // pred_region
      %s429 = ssub.s32 16, 16
      %430 = vsyncadd [#allocation8], %s429
      %s432 = sshll.u32 [#allocation14], 4
      %s433 = int_to_ptr.vmem [resolvable:$true] %s432
      %435 = dma.vmem_to_hbm [thread:$0]  %s433, 16, %s9, [#allocation8]
    $region57: #{tpu_custom_call.1} parent=1 // pred_fallthru
      _
    // Predicated region
    $region58: #{tpu_custom_call.1} parent=1 // pred_check
      _
    $region59: #{tpu_custom_call.1} parent=1 // pred_check_branch
      %437 = sbr.rel (0) target = $region61
    $region60: #{tpu_custom_call.1} parent=1 // pred_region
      %s439 = ssub.s32 16, 16
      %440 = vsyncadd [#allocation16], %s439
      %s442 = sshll.u32 [#allocation15], 4
      %s443 = int_to_ptr.vmem [resolvable:$true] %s442
      %445 = dma.vmem_to_hbm [thread:$0]  %s443, 16, %s10, [#allocation16]
    $region61: #{tpu_custom_call.1} parent=1 // pred_fallthru
      _
    // Predicated region
    $region62: #{tpu_custom_call.1} parent=1 // pred_check
      _
    $region63: #{tpu_custom_call.1} parent=1 // pred_check_branch
      %447 = sbr.rel (0) target = $region65
    $region64: #{tpu_custom_call.1} parent=1 // pred_region
      %448 = dma.done [#allocation8], 16
    $region65: #{tpu_custom_call.1} parent=1 // pred_fallthru
      _
    // Predicated region
    $region66: #{tpu_custom_call.1} parent=1 // pred_check
      _
    $region67: #{tpu_custom_call.1} parent=1 // pred_check_branch
      %450 = sbr.rel (0) target = $region69
    $region68: #{tpu_custom_call.1} parent=1 // pred_region
      %451 = dma.done [#allocation16], 16
    $region69: #{tpu_custom_call.1} parent=1 // pred_fallthru
      _
    %452 = vsyncpa [#allocation7], 1
    %453 = vsyncpa [#allocation10], 1
    %454 = vsyncpa [#allocation13], 1
    %455 = vsyncpa [#allocation8], 1
    %456 = vsyncpa [#allocation16], 1

</llo_original>
